<compile_context>
chip_gen: v5e
topology: v5e:2x2
jax: 0.10.0
libtpu: 0.0.40
codegen_flags: <defaults>
</compile_context>

<pallas_src>
import jax
import jax.numpy as jnp
from jax.experimental import pallas as pl
from jax.experimental.pallas import tpu as pltpu


def ae_kernel(x_ref,
              we1_ref, be1_ref,
              we2_ref, be2_ref,
              wd1_ref, bd1_ref,
              wd2_ref, bd2_ref,
              out_ref):
    cdt = we1_ref.dtype                     # MXU input dtype (f32 or bf16)
    x = x_ref[...].astype(cdt)

    # encoder layer 1: Linear (BN folded into weights) -> ReLU (f32 epilogue)
    h1 = jnp.dot(x, we1_ref[...], preferred_element_type=jnp.float32) + be1_ref[...]
    h1 = jnp.maximum(h1, 0.0)

    # encoder layer 2: Linear -> latent z
    z = jnp.dot(h1.astype(cdt), we2_ref[...],
                preferred_element_type=jnp.float32) + be2_ref[...]

    # decoder layer 1: Linear (BN folded) -> ReLU
    h2 = jnp.dot(z.astype(cdt), wd1_ref[...],
                 preferred_element_type=jnp.float32) + bd1_ref[...]
    h2 = jnp.maximum(h2, 0.0)

    # decoder layer 2: Linear -> reconstruction
    r = jnp.dot(h2.astype(cdt), wd2_ref[...],
                preferred_element_type=jnp.float32) + bd2_ref[...]
    out_ref[...] = r.astype(out_ref.dtype)


def _fold_bn(w, b, gamma, beta, mean, var, eps=1e-5):
    """Fold eval-mode BatchNorm1d into the preceding Linear (f32, trace time)."""
    scale = gamma * jax.lax.rsqrt(var + eps)          # (1, N)
    return w * scale, (b - mean) * scale + beta


def ae_forward(x, params, *, tb=None, compute_dtype=jnp.float32):
    """x: (B, C) float32. params: dict of weights (see init_params)."""
    B, C = x.shape
    H = params["we1"].shape[1]
    L = params["we2"].shape[1]

    # --- trace-time weight preparation (BN fold + optional bf16 cast) ---
    we1f, be1f = _fold_bn(params["we1"], params["be1"], params["g1"],
                          params["bt1"], params["m1"], params["v1"])
    wd1f, bd1f = _fold_bn(params["wd1"], params["bd1"], params["g2"],
                          params["bt2"], params["m2"], params["v2"])

    cdt = compute_dtype
    we1f = we1f.astype(cdt)
    we2 = params["we2"].astype(cdt)
    wd1f = wd1f.astype(cdt)
    wd2 = params["wd2"].astype(cdt)
    # biases stay f32: bias-add / ReLU epilogue is f32 on every chip
    be1f = be1f.astype(jnp.float32)
    be2 = params["be2"].astype(jnp.float32)
    bd1f = bd1f.astype(jnp.float32)
    bd2 = params["bd2"].astype(jnp.float32)

    # --- batch tiling: fill MXU rows, stay far under v7x 64 MiB VMEM ---
    if tb is None:
        tb = min(B, 512)
    n_steps = pl.cdiv(B, tb)
    B_pad = n_steps * tb
    xp = x if B_pad == B else jnp.pad(x, ((0, B_pad - B), (0, 0)))

    def full(shape):
        return pl.BlockSpec(shape, lambda i: (0,) * len(shape))

    in_specs = [
        pl.BlockSpec((tb, C), lambda i: (i, 0)),   # x tile (batch-parallel)
        full((C, H)), full((1, H)),                # encoder L1 (BN folded)
        full((H, L)), full((1, L)),                # encoder L2
        full((L, H)), full((1, H)),                # decoder L1 (BN folded)
        full((H, C)), full((1, C)),                # decoder L2
    ]

    out = pl.pallas_call(
        ae_kernel,
        out_shape=jax.ShapeDtypeStruct((B_pad, C), jnp.float32),
        grid=(n_steps,),
        in_specs=in_specs,
        out_specs=pl.BlockSpec((tb, C), lambda i: (i, 0)),
        compiler_params=pltpu.CompilerParams(
            dimension_semantics=("parallel",)),
    )(xp, we1f, be1f, we2, be2, wd1f, bd1f, wd2, bd2)

    return out[:B] if B_pad != B else out


def init_params(key, c_len, hidden, latent):
    """Deterministic synthetic init mirroring AEncoder/ADecoder parameter shapes."""
    ks = jax.random.split(key, 8)
    f32 = jnp.float32

    def lin(k, fan_in, fan_out):
        w = jax.random.normal(k, (fan_in, fan_out), f32) * (1.0 / jnp.sqrt(fan_in))
        b = jnp.zeros((1, fan_out), f32) + 0.01
        return w, b

    we1, be1 = lin(ks[0], c_len, hidden)     # encoder Linear(c_len -> hidden)
    we2, be2 = lin(ks[1], hidden, latent)    # encoder Linear(hidden -> latent)
    wd1, bd1 = lin(ks[2], latent, hidden)    # decoder Linear(latent -> hidden)
    wd2, bd2 = lin(ks[3], hidden, c_len)     # decoder Linear(hidden -> c_len)

    # BatchNorm1d(hidden) params + running stats (eval mode)
    g1 = jnp.ones((1, hidden), f32)
    bt1 = jnp.zeros((1, hidden), f32)
    m1 = jax.random.normal(ks[4], (1, hidden), f32) * 0.1
    v1 = jnp.abs(jax.random.normal(ks[5], (1, hidden), f32)) * 0.5 + 0.5

    g2 = jnp.ones((1, hidden), f32)
    bt2 = jnp.zeros((1, hidden), f32)
    m2 = jax.random.normal(ks[6], (1, hidden), f32) * 0.1
    v2 = jnp.abs(jax.random.normal(ks[7], (1, hidden), f32)) * 0.5 + 0.5

    return dict(
        we1=we1, be1=be1, g1=g1, bt1=bt1, m1=m1, v1=v1,
        we2=we2, be2=be2,
        wd1=wd1, bd1=bd1, g2=g2, bt2=bt2, m2=m2, v2=v2,
        wd2=wd2, bd2=bd2,
    )


def ae_forward_ref(x, p):
    """Pure-JAX reference of the same forward (eval-mode BN, unfolded)."""
    eps = 1e-5
    h1 = x @ p["we1"] + p["be1"]
    h1 = (h1 - p["m1"]) * (p["g1"] / jnp.sqrt(p["v1"] + eps)) + p["bt1"]
    h1 = jnp.maximum(h1, 0.0)
    z = h1 @ p["we2"] + p["be2"]
    h2 = z @ p["wd1"] + p["bd1"]
    h2 = (h2 - p["m2"]) * (p["g2"] / jnp.sqrt(p["v2"] + eps)) + p["bt2"]
    h2 = jnp.maximum(h2, 0.0)
    return h2 @ p["wd2"] + p["bd2"]


# TODO(synk): training paths (Adam/StepLR/MSE recon loss, proto loss) are
# host-side orchestration in the PyTorch module and are not kernelized here.

if __name__ == "__main__":
    # Small shapes consistent with the module: batch=16, c_len=256,
    # e_dim=d_dim=[512] (stand-in for [1024]), latent=128.
    B, C, H, L = 16, 256, 512, 128

    key = jax.random.PRNGKey(0)
    kx, kp = jax.random.split(key)
    x = jax.random.normal(kx, (B, C), jnp.float32)
    params = init_params(kp, C, H, L)

    r_ref = ae_forward_ref(x, params)

    # f32 weight path (tight numeric check; BN folded at trace time)
    r32 = jax.block_until_ready(ae_forward(x, params, compute_dtype=jnp.float32))
    assert r32.shape == (B, C)
    assert jnp.max(jnp.abs(r32 - r_ref)) < 1e-3, "f32 mismatch vs reference"

    # bf16 weight/activation path (v6e/v7x roofline), f32 accumulation/epilogue
    rbf = jax.block_until_ready(ae_forward(x, params, compute_dtype=jnp.bfloat16))
    assert rbf.shape == (B, C)
    assert jnp.max(jnp.abs(rbf - r_ref)) < 1.5e-1, "bf16 mismatch vs reference"

    print("KERNEL_OK")
</pallas_src>

<mosaic_0001>
module attributes {stable_mosaic.version = 11 : i64} {
  func.func @ae_kernel(%arg0: i32, %arg1: memref<16x256xf32, #tpu.memory_space<vmem>>, %arg2: memref<256x512xf32, #tpu.memory_space<vmem>>, %arg3: memref<1x512xf32, #tpu.memory_space<vmem>>, %arg4: memref<512x128xf32, #tpu.memory_space<vmem>>, %arg5: memref<1x128xf32, #tpu.memory_space<vmem>>, %arg6: memref<128x512xf32, #tpu.memory_space<vmem>>, %arg7: memref<1x512xf32, #tpu.memory_space<vmem>>, %arg8: memref<512x256xf32, #tpu.memory_space<vmem>>, %arg9: memref<1x256xf32, #tpu.memory_space<vmem>>, %arg10: memref<16x256xf32, #tpu.memory_space<vmem>>) attributes {dimension_semantics = [#tpu.dimension_semantics<parallel>], iteration_bounds = array<i64: 1>, scalar_prefetch = 0 : i64, scratch_operands = 0 : i64, tpu.core_type = #tpu.core_type<tc>, window_params = [{transform_indices = @transform_0, window_bounds = array<i64: 16, 256>}, {pipeline_mode = #tpu.pipeline_mode<synchronous>, transform_indices = @transform_1, window_bounds = array<i64: 256, 512>}, {pipeline_mode = #tpu.pipeline_mode<synchronous>, transform_indices = @transform_2, window_bounds = array<i64: 1, 512>}, {pipeline_mode = #tpu.pipeline_mode<synchronous>, transform_indices = @transform_3, window_bounds = array<i64: 512, 128>}, {pipeline_mode = #tpu.pipeline_mode<synchronous>, transform_indices = @transform_4, window_bounds = array<i64: 1, 128>}, {pipeline_mode = #tpu.pipeline_mode<synchronous>, transform_indices = @transform_5, window_bounds = array<i64: 128, 512>}, {pipeline_mode = #tpu.pipeline_mode<synchronous>, transform_indices = @transform_6, window_bounds = array<i64: 1, 512>}, {pipeline_mode = #tpu.pipeline_mode<synchronous>, transform_indices = @transform_7, window_bounds = array<i64: 512, 256>}, {pipeline_mode = #tpu.pipeline_mode<synchronous>, transform_indices = @transform_8, window_bounds = array<i64: 1, 256>}, {transform_indices = @transform_9, window_bounds = array<i64: 16, 256>}]} {
    %c0 = arith.constant 0 : index
    %c0_0 = arith.constant 0 : index
    %0 = vector.load %arg1[%c0, %c0_0] : memref<16x256xf32, #tpu.memory_space<vmem>>, vector<16x256xf32>
    %c0_1 = arith.constant 0 : index
    %c0_2 = arith.constant 0 : index
    %1 = vector.load %arg2[%c0_1, %c0_2] : memref<256x512xf32, #tpu.memory_space<vmem>>, vector<256x512xf32>
    %cst = arith.constant dense<0.000000e+00> : vector<16x512xf32>
    %2 = tpu.matmul %0, %1, %cst {dimension_numbers = #tpu.dot_dimension_numbers<[1], [0], [0], [1], [0, 0, 1, 1], [], []>} : vector<16x256xf32>, vector<256x512xf32>, vector<16x512xf32> -> vector<16x512xf32>
    %c0_3 = arith.constant 0 : index
    %c0_4 = arith.constant 0 : index
    %3 = vector.load %arg3[%c0_3, %c0_4] : memref<1x512xf32, #tpu.memory_space<vmem>>, vector<1x512xf32>
    %4 = vector.broadcast %3 : vector<1x512xf32> to vector<16x512xf32>
    %5 = arith.addf %2, %4 : vector<16x512xf32>
    %cst_5 = arith.constant 0.000000e+00 : f32
    %6 = vector.broadcast %cst_5 : f32 to vector<16x512xf32>
    %7 = arith.maximumf %5, %6 : vector<16x512xf32>
    %c0_6 = arith.constant 0 : index
    %c0_7 = arith.constant 0 : index
    %8 = vector.load %arg4[%c0_6, %c0_7] : memref<512x128xf32, #tpu.memory_space<vmem>>, vector<512x128xf32>
    %cst_8 = arith.constant dense<0.000000e+00> : vector<16x128xf32>
    %9 = tpu.matmul %7, %8, %cst_8 {dimension_numbers = #tpu.dot_dimension_numbers<[1], [0], [0], [1], [0, 0, 1, 1], [], []>} : vector<16x512xf32>, vector<512x128xf32>, vector<16x128xf32> -> vector<16x128xf32>
    %c0_9 = arith.constant 0 : index
    %c0_10 = arith.constant 0 : index
    %10 = vector.load %arg5[%c0_9, %c0_10] : memref<1x128xf32, #tpu.memory_space<vmem>>, vector<1x128xf32>
    %11 = vector.broadcast %10 : vector<1x128xf32> to vector<16x128xf32>
    %12 = arith.addf %9, %11 : vector<16x128xf32>
    %c0_11 = arith.constant 0 : index
    %c0_12 = arith.constant 0 : index
    %13 = vector.load %arg6[%c0_11, %c0_12] : memref<128x512xf32, #tpu.memory_space<vmem>>, vector<128x512xf32>
    %cst_13 = arith.constant dense<0.000000e+00> : vector<16x512xf32>
    %14 = tpu.matmul %12, %13, %cst_13 {dimension_numbers = #tpu.dot_dimension_numbers<[1], [0], [0], [1], [0, 0, 1, 1], [], []>} : vector<16x128xf32>, vector<128x512xf32>, vector<16x512xf32> -> vector<16x512xf32>
    %c0_14 = arith.constant 0 : index
    %c0_15 = arith.constant 0 : index
    %15 = vector.load %arg7[%c0_14, %c0_15] : memref<1x512xf32, #tpu.memory_space<vmem>>, vector<1x512xf32>
    %16 = vector.broadcast %15 : vector<1x512xf32> to vector<16x512xf32>
    %17 = arith.addf %14, %16 : vector<16x512xf32>
    %cst_16 = arith.constant 0.000000e+00 : f32
    %18 = vector.broadcast %cst_16 : f32 to vector<16x512xf32>
    %19 = arith.maximumf %17, %18 : vector<16x512xf32>
    %c0_17 = arith.constant 0 : index
    %c0_18 = arith.constant 0 : index
    %20 = vector.load %arg8[%c0_17, %c0_18] : memref<512x256xf32, #tpu.memory_space<vmem>>, vector<512x256xf32>
    %cst_19 = arith.constant dense<0.000000e+00> : vector<16x256xf32>
    %21 = tpu.matmul %19, %20, %cst_19 {dimension_numbers = #tpu.dot_dimension_numbers<[1], [0], [0], [1], [0, 0, 1, 1], [], []>} : vector<16x512xf32>, vector<512x256xf32>, vector<16x256xf32> -> vector<16x256xf32>
    %c0_20 = arith.constant 0 : index
    %c0_21 = arith.constant 0 : index
    %22 = vector.load %arg9[%c0_20, %c0_21] : memref<1x256xf32, #tpu.memory_space<vmem>>, vector<1x256xf32>
    %23 = vector.broadcast %22 : vector<1x256xf32> to vector<16x256xf32>
    %24 = arith.addf %21, %23 : vector<16x256xf32>
    %c0_22 = arith.constant 0 : index
    %c0_23 = arith.constant 0 : index
    %25 = vector.load %arg10[%c0_22, %c0_23] : memref<16x256xf32, #tpu.memory_space<vmem>>, vector<16x256xf32>
    tpu.vector_store %arg10[%c0_22, %c0_23], %24 {strides = array<i32>} : memref<16x256xf32, #tpu.memory_space<vmem>>, vector<16x256xf32>,
    return
  }
  func.func @transform_0(%arg0: i32) -> (i32, i32) {
    %c0_i32 = arith.constant 0 : i32
    %c0_i32_0 = arith.constant 0 : i32
    return %arg0, %c0_i32 : i32, i32
  }
  func.func @transform_1(%arg0: i32) -> (i32, i32) {
    %c0_i32 = arith.constant 0 : i32
    %c0_i32_0 = arith.constant 0 : i32
    %c0_i32_1 = arith.constant 0 : i32
    return %c0_i32, %c0_i32_0 : i32, i32
  }
  func.func @transform_2(%arg0: i32) -> (i32, i32) {
    %c0_i32 = arith.constant 0 : i32
    %c0_i32_0 = arith.constant 0 : i32
    %c0_i32_1 = arith.constant 0 : i32
    return %c0_i32, %c0_i32_0 : i32, i32
  }
  func.func @transform_3(%arg0: i32) -> (i32, i32) {
    %c0_i32 = arith.constant 0 : i32
    %c0_i32_0 = arith.constant 0 : i32
    %c0_i32_1 = arith.constant 0 : i32
    return %c0_i32, %c0_i32_0 : i32, i32
  }
  func.func @transform_4(%arg0: i32) -> (i32, i32) {
    %c0_i32 = arith.constant 0 : i32
    %c0_i32_0 = arith.constant 0 : i32
    %c0_i32_1 = arith.constant 0 : i32
    return %c0_i32, %c0_i32_0 : i32, i32
  }
  func.func @transform_5(%arg0: i32) -> (i32, i32) {
    %c0_i32 = arith.constant 0 : i32
    %c0_i32_0 = arith.constant 0 : i32
    %c0_i32_1 = arith.constant 0 : i32
    return %c0_i32, %c0_i32_0 : i32, i32
  }
  func.func @transform_6(%arg0: i32) -> (i32, i32) {
    %c0_i32 = arith.constant 0 : i32
    %c0_i32_0 = arith.constant 0 : i32
    %c0_i32_1 = arith.constant 0 : i32
    return %c0_i32, %c0_i32_0 : i32, i32
  }
  func.func @transform_7(%arg0: i32) -> (i32, i32) {
    %c0_i32 = arith.constant 0 : i32
    %c0_i32_0 = arith.constant 0 : i32
    %c0_i32_1 = arith.constant 0 : i32
    return %c0_i32, %c0_i32_0 : i32, i32
  }
  func.func @transform_8(%arg0: i32) -> (i32, i32) {
    %c0_i32 = arith.constant 0 : i32
    %c0_i32_0 = arith.constant 0 : i32
    %c0_i32_1 = arith.constant 0 : i32
    return %c0_i32, %c0_i32_0 : i32, i32
  }
  func.func @transform_9(%arg0: i32) -> (i32, i32) {
    %c0_i32 = arith.constant 0 : i32
    %c0_i32_0 = arith.constant 0 : i32
    return %arg0, %c0_i32 : i32, i32
  }
}

</mosaic_0001>

<llo_original>
// kernel: tpu_custom_call.1
$region0: #{tpu_custom_call.1}
  #allocation0 [shape = 'u32[]', space=smem, size = 0x4, offset = 0x4, fixed_abs, tag = 'smem constant byte address 0x4 - core index']
  #allocation1 [shape = 'u32[72,128]{1,0:T(1,128)}', space=vmem, size = 0x9000, scoped, tag = 'internal scratch']
  %s0 = inlined_call_operand.hbm [shape: f32[16,256], index: 0, kind: input, shape index: {}]
  %s1 = inlined_call_operand.hbm [shape: f32[256,512], index: 1, kind: input, shape index: {}]
  %s2 = inlined_call_operand.hbm [shape: f32[1,512], index: 2, kind: input, shape index: {}]
  %s3 = inlined_call_operand.hbm [shape: f32[512,128], index: 3, kind: input, shape index: {}]
  %s4 = inlined_call_operand.hbm [shape: f32[1,128], index: 4, kind: input, shape index: {}]
  %s5 = inlined_call_operand.hbm [shape: f32[128,512], index: 5, kind: input, shape index: {}]
  %s6 = inlined_call_operand.vmem [shape: f32[1,512], index: 6, kind: input, shape index: {}]
  %s7 = inlined_call_operand.hbm [shape: f32[512,256], index: 7, kind: input, shape index: {}]
  %s8 = inlined_call_operand.vmem [shape: f32[1,256], index: 8, kind: input, shape index: {}]
  %s9 = inlined_call_operand.hbm [shape: f32[16,256], index: 9, kind: output, shape index: {}]
  %s10 = sld [smem:[#allocation0]]
  $region74: #{tpu_custom_call.1} parent=0
    _
  %s12 = ssub.s32 1, %s10
  %s13 = scalar_select 0, %s12, %s10
  $region1: #{tpu_custom_call.1} parent=0
    #allocation2 [shape = 'u8[16384]{0}', space=vmem, size = 0x4000, scoped, tag = 'input window, operand 0, single buffered']
    #allocation3 [shape = 's32[1]{0}', space=sflag, size = 0x4, scoped, tag = 'scoped memory for tpu_custom_call.1']
    #allocation4 [shape = 's32[1]{0}', space=sflag, size = 0x4, scoped, tag = 'scoped memory for tpu_custom_call.1']
    #allocation5 [shape = 'u8[524288]{0}', space=vmem, size = 0x80000, scoped, tag = 'input window, operand 1, single buffered']
    #allocation6 [shape = 's32[1]{0}', space=sflag, size = 0x4, scoped, tag = 'scoped memory for tpu_custom_call.1']
    #allocation7 [shape = 'u8[2048]{0}', space=vmem, size = 0x800, scoped, tag = 'input window, operand 2, single buffered']
    #allocation8 [shape = 'u8[262144]{0}', space=vmem, size = 0x40000, scoped, tag = 'input window, operand 3, single buffered']
    #allocation9 [shape = 's32[1]{0}', space=sflag, size = 0x4, scoped, tag = 'scoped memory for tpu_custom_call.1']
    #allocation10 [shape = 'u8[512]{0}', space=vmem, size = 0x400, scoped, tag = 'input window, operand 4, single buffered']
    #allocation11 [shape = 'u8[262144]{0}', space=vmem, size = 0x40000, scoped, tag = 'input window, operand 5, single buffered']
    #allocation12 [shape = 's32[1]{0}', space=sflag, size = 0x4, scoped, tag = 'scoped memory for tpu_custom_call.1']
    #allocation13 [shape = 'u8[524288]{0}', space=vmem, size = 0x80000, scoped, tag = 'input window, operand 7, single buffered']
    #allocation14 [shape = 'u8[16384]{0}', space=vmem, size = 0x4000, scoped, tag = 'output window, operand 0, single buffered']
    %14 = vsyncpa [#allocation3], 0
    %15 = vsyncpa [#allocation6], 0
    %16 = vsyncpa [#allocation9], 0
    %17 = vsyncpa [#allocation12], 0
    %18 = vsyncpa [#allocation4], 0
    // Predicated region
    $region2: #{tpu_custom_call.1} parent=1 // pred_check
      _
    $region3: #{tpu_custom_call.1} parent=1 // pred_check_branch
      %20 = sbr.rel (0) target = $region5
    $region4: #{tpu_custom_call.1} parent=1 // pred_region
      %22 = vsyncadd [#allocation3], 0
      %s23 = sshll.u32 %s0, 4
      %s24 = int_to_ptr.hbm [resolvable:$true] %s23
      %s25 = sshll.u32 [#allocation2], 4
      %s26 = int_to_ptr.vmem [resolvable:$true] %s25
      %31 = dma.hbm_to_vmem [thread:$0]  %s24, 512, %s26, [#allocation3], 256, 256, 16
    $region5: #{tpu_custom_call.1} parent=1 // pred_fallthru
      _
    // Predicated region
    $region6: #{tpu_custom_call.1} parent=1 // pred_check
      _
    $region7: #{tpu_custom_call.1} parent=1 // pred_check_branch
      %33 = sbr.rel (0) target = $region9
    $region8: #{tpu_custom_call.1} parent=1 // pred_region
      %35 = vsyncadd [#allocation6], 0
      %s36 = sshll.u32 %s1, 4
      %s37 = int_to_ptr.hbm [resolvable:$true] %s36
      %s38 = sshll.u32 [#allocation5], 4
      %s39 = int_to_ptr.vmem [resolvable:$true] %s38
      %44 = dma.hbm_to_vmem [thread:$0]  %s37, 16384, %s39, [#allocation6], 512, 512, 32
    $region9: #{tpu_custom_call.1} parent=1 // pred_fallthru
      _
    // Predicated region
    $region10: #{tpu_custom_call.1} parent=1 // pred_check
      _
    $region11: #{tpu_custom_call.1} parent=1 // pred_check_branch
      %46 = sbr.rel (0) target = $region13
    $region12: #{tpu_custom_call.1} parent=1 // pred_region
      %48 = vsyncadd [#allocation6], 0
      %s50 = sshll.u32 %s2, 4
      %s51 = int_to_ptr.hbm [resolvable:$true] %s50
      %s52 = sshll.u32 [#allocation7], 4
      %s53 = int_to_ptr.vmem [resolvable:$true] %s52
      %55 = dma.hbm_to_vmem [thread:$0]  %s51, 64, %s53, [#allocation6]
    $region13: #{tpu_custom_call.1} parent=1 // pred_fallthru
      _
    // Predicated region
    $region14: #{tpu_custom_call.1} parent=1 // pred_check
      _
    $region15: #{tpu_custom_call.1} parent=1 // pred_check_branch
      %57 = sbr.rel (0) target = $region17
    $region16: #{tpu_custom_call.1} parent=1 // pred_region
      %59 = vsyncadd [#allocation9], 0
      %s60 = sshll.u32 %s3, 4
      %s61 = int_to_ptr.hbm [resolvable:$true] %s60
      %s62 = sshll.u32 [#allocation8], 4
      %s63 = int_to_ptr.vmem [resolvable:$true] %s62
      %68 = dma.hbm_to_vmem [thread:$0]  %s61, 8192, %s63, [#allocation9], 128, 128, 8
    $region17: #{tpu_custom_call.1} parent=1 // pred_fallthru
      _
    // Predicated region
    $region18: #{tpu_custom_call.1} parent=1 // pred_check
      _
    $region19: #{tpu_custom_call.1} parent=1 // pred_check_branch
      %70 = sbr.rel (0) target = $region21
    $region20: #{tpu_custom_call.1} parent=1 // pred_region
      %72 = vsyncadd [#allocation9], 0
      %s74 = sshll.u32 %s4, 4
      %s75 = int_to_ptr.hbm [resolvable:$true] %s74
      %s76 = sshll.u32 [#allocation10], 4
      %s77 = int_to_ptr.vmem [resolvable:$true] %s76
      %79 = dma.hbm_to_vmem [thread:$0]  %s75, 16, %s77, [#allocation9]
    $region21: #{tpu_custom_call.1} parent=1 // pred_fallthru
      _
    // Predicated region
    $region22: #{tpu_custom_call.1} parent=1 // pred_check
      _
    $region23: #{tpu_custom_call.1} parent=1 // pred_check_branch
      %81 = sbr.rel (0) target = $region25
    $region24: #{tpu_custom_call.1} parent=1 // pred_region
      %83 = vsyncadd [#allocation12], 0
      %s84 = sshll.u32 %s5, 4
      %s85 = int_to_ptr.hbm [resolvable:$true] %s84
      %s86 = sshll.u32 [#allocation11], 4
      %s87 = int_to_ptr.vmem [resolvable:$true] %s86
      %92 = dma.hbm_to_vmem [thread:$0]  %s85, 8192, %s87, [#allocation12], 512, 512, 32
    $region25: #{tpu_custom_call.1} parent=1 // pred_fallthru
      _
    // Predicated region
    $region26: #{tpu_custom_call.1} parent=1 // pred_check
      _
    $region27: #{tpu_custom_call.1} parent=1 // pred_check_branch
      %94 = sbr.rel (0) target = $region29
    $region28: #{tpu_custom_call.1} parent=1 // pred_region
      _
    $region29: #{tpu_custom_call.1} parent=1 // pred_fallthru
      _
    // Predicated region
    $region30: #{tpu_custom_call.1} parent=1 // pred_check
      _
    $region31: #{tpu_custom_call.1} parent=1 // pred_check_branch
      %96 = sbr.rel (0) target = $region33
    $region32: #{tpu_custom_call.1} parent=1 // pred_region
      %98 = vsyncadd [#allocation12], 0
      %s99 = sshll.u32 %s7, 4
      %s100 = int_to_ptr.hbm [resolvable:$true] %s99
      %s101 = sshll.u32 [#allocation13], 4
      %s102 = int_to_ptr.vmem [resolvable:$true] %s101
      %107 = dma.hbm_to_vmem [thread:$0]  %s100, 16384, %s102, [#allocation12], 256, 256, 16
    $region33: #{tpu_custom_call.1} parent=1 // pred_fallthru
      _
    // Predicated region
    $region34: #{tpu_custom_call.1} parent=1 // pred_check
      _
    $region35: #{tpu_custom_call.1} parent=1 // pred_check_branch
      %109 = sbr.rel (0) target = $region37
    $region36: #{tpu_custom_call.1} parent=1 // pred_region
      _
    $region37: #{tpu_custom_call.1} parent=1 // pred_fallthru
      _
    // Predicated region
    $region38: #{tpu_custom_call.1} parent=1 // pred_check
      _
    $region39: #{tpu_custom_call.1} parent=1 // pred_check_branch
      %111 = sbr.rel (0) target = $region41
    $region40: #{tpu_custom_call.1} parent=1 // pred_region
      %113 = dma.done [#allocation3], 512
    $region41: #{tpu_custom_call.1} parent=1 // pred_fallthru
      _
    // Predicated region
    $region42: #{tpu_custom_call.1} parent=1 // pred_check
      _
    $region43: #{tpu_custom_call.1} parent=1 // pred_check_branch
      %115 = sbr.rel (0) target = $region45
    $region44: #{tpu_custom_call.1} parent=1 // pred_region
      %117 = dma.done [#allocation6], 16384
    $region45: #{tpu_custom_call.1} parent=1 // pred_fallthru
      _
    // Predicated region
    $region46: #{tpu_custom_call.1} parent=1 // pred_check
      _
    $region47: #{tpu_custom_call.1} parent=1 // pred_check_branch
      %119 = sbr.rel (0) target = $region49
    $region48: #{tpu_custom_call.1} parent=1 // pred_region
      %121 = dma.done [#allocation6], 64
    $region49: #{tpu_custom_call.1} parent=1 // pred_fallthru
      _
    // Predicated region
    $region50: #{tpu_custom_call.1} parent=1 // pred_check
      _
    $region51: #{tpu_custom_call.1} parent=1 // pred_check_branch
      %123 = sbr.rel (0) target = $region53
    $region52: #{tpu_custom_call.1} parent=1 // pred_region
      %125 = dma.done [#allocation9], 8192
    $region53: #{tpu_custom_call.1} parent=1 // pred_fallthru
      _
    // Predicated region
    $region54: #{tpu_custom_call.1} parent=1 // pred_check
      _
    $region55: #{tpu_custom_call.1} parent=1 // pred_check_branch
      %127 = sbr.rel (0) target = $region57
    $region56: #{tpu_custom_call.1} parent=1 // pred_region
      %129 = dma.done [#allocation9], 16
    $region57: #{tpu_custom_call.1} parent=1 // pred_fallthru
      _
    // Predicated region
    $region58: #{tpu_custom_call.1} parent=1 // pred_check
      _
    $region59: #{tpu_custom_call.1} parent=1 // pred_check_branch
      %131 = sbr.rel (0) target = $region61
    $region60: #{tpu_custom_call.1} parent=1 // pred_region
      %133 = dma.done [#allocation12], 8192
    $region61: #{tpu_custom_call.1} parent=1 // pred_fallthru
      _
    // Predicated region
    $region62: #{tpu_custom_call.1} parent=1 // pred_check
      _
    $region63: #{tpu_custom_call.1} parent=1 // pred_check_branch
      %135 = sbr.rel (0) target = $region65
    $region64: #{tpu_custom_call.1} parent=1 // pred_region
      %137 = dma.done [#allocation12], 16384
    $region65: #{tpu_custom_call.1} parent=1 // pred_fallthru
      _
    %v138 = vld [vmem:[#allocation2] sm:$0xff]
    %v139 = vld [vmem:[#allocation2 + $0x8] sm:$0xff]
    %v140 = vld [vmem:[#allocation2 + $0x10] sm:$0xff]
    %v141 = vld [vmem:[#allocation2 + $0x18] sm:$0xff]
    %v142 = vld [vmem:[#allocation5] sm:$0xff]
    %v143 = vld [vmem:[#allocation5 + $0x8] sm:$0xff]
    %v144 = vld [vmem:[#allocation5 + $0x10] sm:$0xff]
    %v145 = vld [vmem:[#allocation5 + $0x18] sm:$0xff]
    %v146 = vld [vmem:[#allocation5 + $0x20] sm:$0xff]
    %v147 = vld [vmem:[#allocation5 + $0x28] sm:$0xff]
    %v148 = vld [vmem:[#allocation5 + $0x30] sm:$0xff]
    %v149 = vld [vmem:[#allocation5 + $0x38] sm:$0xff]
    %v150 = vld [vmem:[#allocation5 + $0x40] sm:$0xff]
    %v151 = vld [vmem:[#allocation5 + $0x48] sm:$0xff]
    %v152 = vld [vmem:[#allocation5 + $0x50] sm:$0xff]
    %v153 = vld [vmem:[#allocation5 + $0x58] sm:$0xff]
    %v154 = vld [vmem:[#allocation5 + $0x60] sm:$0xff]
    %v155 = vld [vmem:[#allocation5 + $0x68] sm:$0xff]
    %v156 = vld [vmem:[#allocation5 + $0x70] sm:$0xff]
    %v157 = vld [vmem:[#allocation5 + $0x78] sm:$0xff]
    %v158 = vld [vmem:[#allocation5 + $0x80] sm:$0xff]
    %v159 = vld [vmem:[#allocation5 + $0x88] sm:$0xff]
    %v160 = vld [vmem:[#allocation5 + $0x90] sm:$0xff]
    %v161 = vld [vmem:[#allocation5 + $0x98] sm:$0xff]
    %v162 = vld [vmem:[#allocation5 + $0xa0] sm:$0xff]
    %v163 = vld [vmem:[#allocation5 + $0xa8] sm:$0xff]
    %v164 = vld [vmem:[#allocation5 + $0xb0] sm:$0xff]
    %v165 = vld [vmem:[#allocation5 + $0xb8] sm:$0xff]
    %v166 = vld [vmem:[#allocation5 + $0xc0] sm:$0xff]
    %v167 = vld [vmem:[#allocation5 + $0xc8] sm:$0xff]
    %v168 = vld [vmem:[#allocation5 + $0xd0] sm:$0xff]
    %v169 = vld [vmem:[#allocation5 + $0xd8] sm:$0xff]
    %v170 = vld [vmem:[#allocation5 + $0xe0] sm:$0xff]
    %v171 = vld [vmem:[#allocation5 + $0xe8] sm:$0xff]
    %v172 = vld [vmem:[#allocation5 + $0xf0] sm:$0xff]
    %v173 = vld [vmem:[#allocation5 + $0xf8] sm:$0xff]
    %v174 = vld [vmem:[#allocation5 + $0x100] sm:$0xff]
    %v175 = vld [vmem:[#allocation5 + $0x108] sm:$0xff]
    %v176 = vld [vmem:[#allocation5 + $0x110] sm:$0xff]
    %v177 = vld [vmem:[#allocation5 + $0x118] sm:$0xff]
    %v178 = vld [vmem:[#allocation5 + $0x120] sm:$0xff]
    %v179 = vld [vmem:[#allocation5 + $0x128] sm:$0xff]
    %v180 = vld [vmem:[#allocation5 + $0x130] sm:$0xff]
    %v181 = vld [vmem:[#allocation5 + $0x138] sm:$0xff]
    %v182 = vld [vmem:[#allocation5 + $0x140] sm:$0xff]
    %v183 = vld [vmem:[#allocation5 + $0x148] sm:$0xff]
    %v184 = vld [vmem:[#allocation5 + $0x150] sm:$0xff]
    %v185 = vld [vmem:[#allocation5 + $0x158] sm:$0xff]
    %v186 = vld [vmem:[#allocation5 + $0x160] sm:$0xff]
    %v187 = vld [vmem:[#allocation5 + $0x168] sm:$0xff]
    %v188 = vld [vmem:[#allocation5 + $0x170] sm:$0xff]
    %v189 = vld [vmem:[#allocation5 + $0x178] sm:$0xff]
    %v190 = vld [vmem:[#allocation5 + $0x180] sm:$0xff]
    %v191 = vld [vmem:[#allocation5 + $0x188] sm:$0xff]
    %v192 = vld [vmem:[#allocation5 + $0x190] sm:$0xff]
    %v193 = vld [vmem:[#allocation5 + $0x198] sm:$0xff]
    %v194 = vld [vmem:[#allocation5 + $0x1a0] sm:$0xff]
    %v195 = vld [vmem:[#allocation5 + $0x1a8] sm:$0xff]
    %v196 = vld [vmem:[#allocation5 + $0x1b0] sm:$0xff]
    %v197 = vld [vmem:[#allocation5 + $0x1b8] sm:$0xff]
    %v198 = vld [vmem:[#allocation5 + $0x1c0] sm:$0xff]
    %v199 = vld [vmem:[#allocation5 + $0x1c8] sm:$0xff]
    %v200 = vld [vmem:[#allocation5 + $0x1d0] sm:$0xff]
    %v201 = vld [vmem:[#allocation5 + $0x1d8] sm:$0xff]
    %v202 = vld [vmem:[#allocation5 + $0x1e0] sm:$0xff]
    %v203 = vld [vmem:[#allocation5 + $0x1e8] sm:$0xff]
    %v204 = vld [vmem:[#allocation5 + $0x1f0] sm:$0xff]
    %v205 = vld [vmem:[#allocation5 + $0x1f8] sm:$0xff]
    %v206 = vld [vmem:[#allocation5 + $0x200] sm:$0xff]
    %v207 = vld [vmem:[#allocation5 + $0x208] sm:$0xff]
    %v208 = vld [vmem:[#allocation5 + $0x210] sm:$0xff]
    %v209 = vld [vmem:[#allocation5 + $0x218] sm:$0xff]
    %v210 = vld [vmem:[#allocation5 + $0x220] sm:$0xff]
    %v211 = vld [vmem:[#allocation5 + $0x228] sm:$0xff]
    %v212 = vld [vmem:[#allocation5 + $0x230] sm:$0xff]
    %v213 = vld [vmem:[#allocation5 + $0x238] sm:$0xff]
    %v214 = vld [vmem:[#allocation5 + $0x240] sm:$0xff]
    %v215 = vld [vmem:[#allocation5 + $0x248] sm:$0xff]
    %v216 = vld [vmem:[#allocation5 + $0x250] sm:$0xff]
    %v217 = vld [vmem:[#allocation5 + $0x258] sm:$0xff]
    %v218 = vld [vmem:[#allocation5 + $0x260] sm:$0xff]
    %v219 = vld [vmem:[#allocation5 + $0x268] sm:$0xff]
    %v220 = vld [vmem:[#allocation5 + $0x270] sm:$0xff]
    %v221 = vld [vmem:[#allocation5 + $0x278] sm:$0xff]
    %v222 = vld [vmem:[#allocation5 + $0x280] sm:$0xff]
    %v223 = vld [vmem:[#allocation5 + $0x288] sm:$0xff]
    %v224 = vld [vmem:[#allocation5 + $0x290] sm:$0xff]
    %v225 = vld [vmem:[#allocation5 + $0x298] sm:$0xff]
    %v226 = vld [vmem:[#allocation5 + $0x2a0] sm:$0xff]
    %v227 = vld [vmem:[#allocation5 + $0x2a8] sm:$0xff]
    %v228 = vld [vmem:[#allocation5 + $0x2b0] sm:$0xff]
    %v229 = vld [vmem:[#allocation5 + $0x2b8] sm:$0xff]
    %v230 = vld [vmem:[#allocation5 + $0x2c0] sm:$0xff]
    %v231 = vld [vmem:[#allocation5 + $0x2c8] sm:$0xff]
    %v232 = vld [vmem:[#allocation5 + $0x2d0] sm:$0xff]
    %v233 = vld [vmem:[#allocation5 + $0x2d8] sm:$0xff]
    %v234 = vld [vmem:[#allocation5 + $0x2e0] sm:$0xff]
    %v235 = vld [vmem:[#allocation5 + $0x2e8] sm:$0xff]
    %v236 = vld [vmem:[#allocation5 + $0x2f0] sm:$0xff]
    %v237 = vld [vmem:[#allocation5 + $0x2f8] sm:$0xff]
    %v238 = vld [vmem:[#allocation5 + $0x300] sm:$0xff]
    %v239 = vld [vmem:[#allocation5 + $0x308] sm:$0xff]
    %v240 = vld [vmem:[#allocation5 + $0x310] sm:$0xff]
    %v241 = vld [vmem:[#allocation5 + $0x318] sm:$0xff]
    %v242 = vld [vmem:[#allocation5 + $0x320] sm:$0xff]
    %v243 = vld [vmem:[#allocation5 + $0x328] sm:$0xff]
    %v244 = vld [vmem:[#allocation5 + $0x330] sm:$0xff]
    %v245 = vld [vmem:[#allocation5 + $0x338] sm:$0xff]
    %v246 = vld [vmem:[#allocation5 + $0x340] sm:$0xff]
    %v247 = vld [vmem:[#allocation5 + $0x348] sm:$0xff]
    %v248 = vld [vmem:[#allocation5 + $0x350] sm:$0xff]
    %v249 = vld [vmem:[#allocation5 + $0x358] sm:$0xff]
    %v250 = vld [vmem:[#allocation5 + $0x360] sm:$0xff]
    %v251 = vld [vmem:[#allocation5 + $0x368] sm:$0xff]
    %v252 = vld [vmem:[#allocation5 + $0x370] sm:$0xff]
    %v253 = vld [vmem:[#allocation5 + $0x378] sm:$0xff]
    %v254 = vld [vmem:[#allocation5 + $0x380] sm:$0xff]
    %v255 = vld [vmem:[#allocation5 + $0x388] sm:$0xff]
    %v256 = vld [vmem:[#allocation5 + $0x390] sm:$0xff]
    %v257 = vld [vmem:[#allocation5 + $0x398] sm:$0xff]
    %v258 = vld [vmem:[#allocation5 + $0x3a0] sm:$0xff]
    %v259 = vld [vmem:[#allocation5 + $0x3a8] sm:$0xff]
    %v260 = vld [vmem:[#allocation5 + $0x3b0] sm:$0xff]
    %v261 = vld [vmem:[#allocation5 + $0x3b8] sm:$0xff]
    %v262 = vld [vmem:[#allocation5 + $0x3c0] sm:$0xff]
    %v263 = vld [vmem:[#allocation5 + $0x3c8] sm:$0xff]
    %v264 = vld [vmem:[#allocation5 + $0x3d0] sm:$0xff]
    %v265 = vld [vmem:[#allocation5 + $0x3d8] sm:$0xff]
    %v266 = vld [vmem:[#allocation5 + $0x3e0] sm:$0xff]
    %v267 = vld [vmem:[#allocation5 + $0x3e8] sm:$0xff]
    %v268 = vld [vmem:[#allocation5 + $0x3f0] sm:$0xff]
    %v269 = vld [vmem:[#allocation5 + $0x3f8] sm:$0xff]
    %v270 = vld [vmem:[#allocation7] sm:$0xf]
    %v272 = vperm.slane %v270, 0
    %v273 = vperm.slane %v270, 1
    %v274 = vperm.slane %v270, 2
    %v275 = vperm.slane %v270, 3
    %280 = vmatpush.msra.mxu0 %v202
    %281 = vmatpush.msra.mxu0 %v198
    %282 = vmatpush.msra.mxu0 %v194
    %283 = vmatpush.msra.mxu0 %v190
    %284 = vmatpush.msra.mxu0 %v186
    %285 = vmatpush.msra.mxu0 %v182
    %286 = vmatpush.msra.mxu0 %v178
    %287 = vmatpush.msra.mxu0 %v174
    %288 = vmatpush.msra.mxu0 %v170
    %289 = vmatpush.msra.mxu0 %v166
    %290 = vmatpush.msra.mxu0 %v162
    %291 = vmatpush.msra.mxu0 %v158
    %292 = vmatpush.msra.mxu0 %v154
    %293 = vmatpush.msra.mxu0 %v150
    %294 = vmatpush.msra.mxu0 %v146
    %295 = vmatpush.msra.mxu0 %v142
    %296 = vmatmul.f32.gmra.mxu0 %v138
    %v297 = vpop.f32.mrf.mxu0
    %v298 = vadd.f32 %v272, %v297
    %299 = vmatmul.f32.gmra.mxu0 %v140
    %v300 = vpop.f32.mrf.mxu0
    %v301 = vadd.f32 %v272, %v300
    %302 = vdwg.mxu0
    %303 = vmatpush.msra.mxu0 %v266
    %304 = vmatpush.msra.mxu0 %v262
    %305 = vmatpush.msra.mxu0 %v258
    %306 = vmatpush.msra.mxu0 %v254
    %307 = vmatpush.msra.mxu0 %v250
    %308 = vmatpush.msra.mxu0 %v246
    %309 = vmatpush.msra.mxu0 %v242
    %310 = vmatpush.msra.mxu0 %v238
    %311 = vmatpush.msra.mxu0 %v234
    %312 = vmatpush.msra.mxu0 %v230
    %313 = vmatpush.msra.mxu0 %v226
    %314 = vmatpush.msra.mxu0 %v222
    %315 = vmatpush.msra.mxu0 %v218
    %316 = vmatpush.msra.mxu0 %v214
    %317 = vmatpush.msra.mxu0 %v210
    %318 = vmatpush.msra.mxu0 %v206
    %319 = vmatmul.f32.gmra.mxu0 %v139
    %v320 = vpop.f32.mrf.mxu0
    %v321 = vadd.f32 %v298, %v320
    %322 = vmatmul.f32.gmra.mxu0 %v141
    %v323 = vpop.f32.mrf.mxu0
    %v324 = vadd.f32 %v301, %v323
    %325 = vdwg.mxu0
    %326 = vmatpush.msra.mxu0 %v203
    %327 = vmatpush.msra.mxu0 %v199
    %328 = vmatpush.msra.mxu0 %v195
    %329 = vmatpush.msra.mxu0 %v191
    %330 = vmatpush.msra.mxu0 %v187
    %331 = vmatpush.msra.mxu0 %v183
    %332 = vmatpush.msra.mxu0 %v179
    %333 = vmatpush.msra.mxu0 %v175
    %334 = vmatpush.msra.mxu0 %v171
    %335 = vmatpush.msra.mxu0 %v167
    %336 = vmatpush.msra.mxu0 %v163
    %337 = vmatpush.msra.mxu0 %v159
    %338 = vmatpush.msra.mxu0 %v155
    %339 = vmatpush.msra.mxu0 %v151
    %340 = vmatpush.msra.mxu0 %v147
    %341 = vmatpush.msra.mxu0 %v143
    %342 = vmatmul.f32.gmra.mxu0 %v138
    %v343 = vpop.f32.mrf.mxu0
    %v344 = vadd.f32 %v273, %v343
    %345 = vmatmul.f32.gmra.mxu0 %v140
    %v346 = vpop.f32.mrf.mxu0
    %v347 = vadd.f32 %v273, %v346
    %348 = vdwg.mxu0
    %349 = vmatpush.msra.mxu0 %v267
    %350 = vmatpush.msra.mxu0 %v263
    %351 = vmatpush.msra.mxu0 %v259
    %352 = vmatpush.msra.mxu0 %v255
    %353 = vmatpush.msra.mxu0 %v251
    %354 = vmatpush.msra.mxu0 %v247
    %355 = vmatpush.msra.mxu0 %v243
    %356 = vmatpush.msra.mxu0 %v239
    %357 = vmatpush.msra.mxu0 %v235
    %358 = vmatpush.msra.mxu0 %v231
    %359 = vmatpush.msra.mxu0 %v227
    %360 = vmatpush.msra.mxu0 %v223
    %361 = vmatpush.msra.mxu0 %v219
    %362 = vmatpush.msra.mxu0 %v215
    %363 = vmatpush.msra.mxu0 %v211
    %364 = vmatpush.msra.mxu0 %v207
    %365 = vmatmul.f32.gmra.mxu0 %v139
    %v366 = vpop.f32.mrf.mxu0
    %v367 = vadd.f32 %v344, %v366
    %368 = vmatmul.f32.gmra.mxu0 %v141
    %v369 = vpop.f32.mrf.mxu0
    %v370 = vadd.f32 %v347, %v369
    %371 = vdwg.mxu0
    %372 = vmatpush.msra.mxu0 %v204
    %373 = vmatpush.msra.mxu0 %v200
    %374 = vmatpush.msra.mxu0 %v196
    %375 = vmatpush.msra.mxu0 %v192
    %376 = vmatpush.msra.mxu0 %v188
    %377 = vmatpush.msra.mxu0 %v184
    %378 = vmatpush.msra.mxu0 %v180
    %379 = vmatpush.msra.mxu0 %v176
    %380 = vmatpush.msra.mxu0 %v172
    %381 = vmatpush.msra.mxu0 %v168
    %382 = vmatpush.msra.mxu0 %v164
    %383 = vmatpush.msra.mxu0 %v160
    %384 = vmatpush.msra.mxu0 %v156
    %385 = vmatpush.msra.mxu0 %v152
    %386 = vmatpush.msra.mxu0 %v148
    %387 = vmatpush.msra.mxu0 %v144
    %388 = vmatmul.f32.gmra.mxu0 %v138
    %v389 = vpop.f32.mrf.mxu0
    %v390 = vadd.f32 %v274, %v389
    %391 = vmatmul.f32.gmra.mxu0 %v140
    %v392 = vpop.f32.mrf.mxu0
    %v393 = vadd.f32 %v274, %v392
    %394 = vdwg.mxu0
    %395 = vmatpush.msra.mxu0 %v268
    %396 = vmatpush.msra.mxu0 %v264
    %397 = vmatpush.msra.mxu0 %v260
    %398 = vmatpush.msra.mxu0 %v256
    %399 = vmatpush.msra.mxu0 %v252
    %400 = vmatpush.msra.mxu0 %v248
    %401 = vmatpush.msra.mxu0 %v244
    %402 = vmatpush.msra.mxu0 %v240
    %403 = vmatpush.msra.mxu0 %v236
    %404 = vmatpush.msra.mxu0 %v232
    %405 = vmatpush.msra.mxu0 %v228
    %406 = vmatpush.msra.mxu0 %v224
    %407 = vmatpush.msra.mxu0 %v220
    %408 = vmatpush.msra.mxu0 %v216
    %409 = vmatpush.msra.mxu0 %v212
    %410 = vmatpush.msra.mxu0 %v208
    %411 = vmatmul.f32.gmra.mxu0 %v139
    %v412 = vpop.f32.mrf.mxu0
    %v413 = vadd.f32 %v390, %v412
    %414 = vmatmul.f32.gmra.mxu0 %v141
    %v415 = vpop.f32.mrf.mxu0
    %v416 = vadd.f32 %v393, %v415
    %417 = vdwg.mxu0
    %418 = vmatpush.msra.mxu0 %v205
    %419 = vmatpush.msra.mxu0 %v201
    %420 = vmatpush.msra.mxu0 %v197
    %421 = vmatpush.msra.mxu0 %v193
    %422 = vmatpush.msra.mxu0 %v189
    %423 = vmatpush.msra.mxu0 %v185
    %424 = vmatpush.msra.mxu0 %v181
    %425 = vmatpush.msra.mxu0 %v177
    %426 = vmatpush.msra.mxu0 %v173
    %427 = vmatpush.msra.mxu0 %v169
    %428 = vmatpush.msra.mxu0 %v165
    %429 = vmatpush.msra.mxu0 %v161
    %430 = vmatpush.msra.mxu0 %v157
    %431 = vmatpush.msra.mxu0 %v153
    %432 = vmatpush.msra.mxu0 %v149
    %433 = vmatpush.msra.mxu0 %v145
    %434 = vmatmul.f32.gmra.mxu0 %v138
    %v435 = vpop.f32.mrf.mxu0
    %v436 = vadd.f32 %v275, %v435
    %437 = vmatmul.f32.gmra.mxu0 %v140
    %v438 = vpop.f32.mrf.mxu0
    %v439 = vadd.f32 %v275, %v438
    %440 = vdwg.mxu0
    %441 = vmatpush.msra.mxu0 %v269
    %442 = vmatpush.msra.mxu0 %v265
    %443 = vmatpush.msra.mxu0 %v261
    %444 = vmatpush.msra.mxu0 %v257
    %445 = vmatpush.msra.mxu0 %v253
    %446 = vmatpush.msra.mxu0 %v249
    %447 = vmatpush.msra.mxu0 %v245
    %448 = vmatpush.msra.mxu0 %v241
    %449 = vmatpush.msra.mxu0 %v237
    %450 = vmatpush.msra.mxu0 %v233
    %451 = vmatpush.msra.mxu0 %v229
    %452 = vmatpush.msra.mxu0 %v225
    %453 = vmatpush.msra.mxu0 %v221
    %454 = vmatpush.msra.mxu0 %v217
    %455 = vmatpush.msra.mxu0 %v213
    %456 = vmatpush.msra.mxu0 %v209
    %457 = vmatmul.f32.gmra.mxu0 %v139
    %v458 = vpop.f32.mrf.mxu0
    %v459 = vadd.f32 %v436, %v458
    %460 = vmatmul.f32.gmra.mxu0 %v141
    %v461 = vpop.f32.mrf.mxu0
    %v462 = vadd.f32 %v439, %v461
    %463 = vdwg.mxu0
    %v464 = vmax.f32 %v321, 0.0
    %v465 = vmax.f32 %v367, 0.0
    %v466 = vmax.f32 %v413, 0.0
    %v467 = vmax.f32 %v459, 0.0
    %v468 = vmax.f32 %v324, 0.0
    %v469 = vmax.f32 %v370, 0.0
    %v470 = vmax.f32 %v416, 0.0
    %v471 = vmax.f32 %v462, 0.0
    %v472 = vld [vmem:[#allocation8] sm:$0xff]
    %v473 = vld [vmem:[#allocation8 + $0x8] sm:$0xff]
    %v474 = vld [vmem:[#allocation8 + $0x10] sm:$0xff]
    %v475 = vld [vmem:[#allocation8 + $0x18] sm:$0xff]
    %v476 = vld [vmem:[#allocation8 + $0x20] sm:$0xff]
    %v477 = vld [vmem:[#allocation8 + $0x28] sm:$0xff]
    %v478 = vld [vmem:[#allocation8 + $0x30] sm:$0xff]
    %v479 = vld [vmem:[#allocation8 + $0x38] sm:$0xff]
    %v480 = vld [vmem:[#allocation8 + $0x40] sm:$0xff]
    %v481 = vld [vmem:[#allocation8 + $0x48] sm:$0xff]
    %v482 = vld [vmem:[#allocation8 + $0x50] sm:$0xff]
    %v483 = vld [vmem:[#allocation8 + $0x58] sm:$0xff]
    %v484 = vld [vmem:[#allocation8 + $0x60] sm:$0xff]
    %v485 = vld [vmem:[#allocation8 + $0x68] sm:$0xff]
    %v486 = vld [vmem:[#allocation8 + $0x70] sm:$0xff]
    %v487 = vld [vmem:[#allocation8 + $0x78] sm:$0xff]
    %v488 = vld [vmem:[#allocation8 + $0x80] sm:$0xff]
    %v489 = vld [vmem:[#allocation8 + $0x88] sm:$0xff]
    %v490 = vld [vmem:[#allocation8 + $0x90] sm:$0xff]
    %v491 = vld [vmem:[#allocation8 + $0x98] sm:$0xff]
    %v492 = vld [vmem:[#allocation8 + $0xa0] sm:$0xff]
    %v493 = vld [vmem:[#allocation8 + $0xa8] sm:$0xff]
    %v494 = vld [vmem:[#allocation8 + $0xb0] sm:$0xff]
    %v495 = vld [vmem:[#allocation8 + $0xb8] sm:$0xff]
    %v496 = vld [vmem:[#allocation8 + $0xc0] sm:$0xff]
    %v497 = vld [vmem:[#allocation8 + $0xc8] sm:$0xff]
    %v498 = vld [vmem:[#allocation8 + $0xd0] sm:$0xff]
    %v499 = vld [vmem:[#allocation8 + $0xd8] sm:$0xff]
    %v500 = vld [vmem:[#allocation8 + $0xe0] sm:$0xff]
    %v501 = vld [vmem:[#allocation8 + $0xe8] sm:$0xff]
    %v502 = vld [vmem:[#allocation8 + $0xf0] sm:$0xff]
    %v503 = vld [vmem:[#allocation8 + $0xf8] sm:$0xff]
    %v504 = vld [vmem:[#allocation8 + $0x100] sm:$0xff]
    %v505 = vld [vmem:[#allocation8 + $0x108] sm:$0xff]
    %v506 = vld [vmem:[#allocation8 + $0x110] sm:$0xff]
    %v507 = vld [vmem:[#allocation8 + $0x118] sm:$0xff]
    %v508 = vld [vmem:[#allocation8 + $0x120] sm:$0xff]
    %v509 = vld [vmem:[#allocation8 + $0x128] sm:$0xff]
    %v510 = vld [vmem:[#allocation8 + $0x130] sm:$0xff]
    %v511 = vld [vmem:[#allocation8 + $0x138] sm:$0xff]
    %v512 = vld [vmem:[#allocation8 + $0x140] sm:$0xff]
    %v513 = vld [vmem:[#allocation8 + $0x148] sm:$0xff]
    %v514 = vld [vmem:[#allocation8 + $0x150] sm:$0xff]
    %v515 = vld [vmem:[#allocation8 + $0x158] sm:$0xff]
    %v516 = vld [vmem:[#allocation8 + $0x160] sm:$0xff]
    %v517 = vld [vmem:[#allocation8 + $0x168] sm:$0xff]
    %v518 = vld [vmem:[#allocation8 + $0x170] sm:$0xff]
    %v519 = vld [vmem:[#allocation8 + $0x178] sm:$0xff]
    %v520 = vld [vmem:[#allocation8 + $0x180] sm:$0xff]
    %v521 = vld [vmem:[#allocation8 + $0x188] sm:$0xff]
    %v522 = vld [vmem:[#allocation8 + $0x190] sm:$0xff]
    %v523 = vld [vmem:[#allocation8 + $0x198] sm:$0xff]
    %v524 = vld [vmem:[#allocation8 + $0x1a0] sm:$0xff]
    %v525 = vld [vmem:[#allocation8 + $0x1a8] sm:$0xff]
    %v526 = vld [vmem:[#allocation8 + $0x1b0] sm:$0xff]
    %v527 = vld [vmem:[#allocation8 + $0x1b8] sm:$0xff]
    %v528 = vld [vmem:[#allocation8 + $0x1c0] sm:$0xff]
    %v529 = vld [vmem:[#allocation8 + $0x1c8] sm:$0xff]
    %v530 = vld [vmem:[#allocation8 + $0x1d0] sm:$0xff]
    %v531 = vld [vmem:[#allocation8 + $0x1d8] sm:$0xff]
    %v532 = vld [vmem:[#allocation8 + $0x1e0] sm:$0xff]
    %v533 = vld [vmem:[#allocation8 + $0x1e8] sm:$0xff]
    %v534 = vld [vmem:[#allocation8 + $0x1f0] sm:$0xff]
    %v535 = vld [vmem:[#allocation8 + $0x1f8] sm:$0xff]
    %v536 = vld [vmem:[#allocation10] sm:$0x1]
    %v538 = vperm.slane %v536, 0
    %540 = vmatpush.msra.mxu0 %v487
    %541 = vmatpush.msra.mxu0 %v486
    %542 = vmatpush.msra.mxu0 %v485
    %543 = vmatpush.msra.mxu0 %v484
    %544 = vmatpush.msra.mxu0 %v483
    %545 = vmatpush.msra.mxu0 %v482
    %546 = vmatpush.msra.mxu0 %v481
    %547 = vmatpush.msra.mxu0 %v480
    %548 = vmatpush.msra.mxu0 %v479
    %549 = vmatpush.msra.mxu0 %v478
    %550 = vmatpush.msra.mxu0 %v477
    %551 = vmatpush.msra.mxu0 %v476
    %552 = vmatpush.msra.mxu0 %v475
    %553 = vmatpush.msra.mxu0 %v474
    %554 = vmatpush.msra.mxu0 %v473
    %555 = vmatpush.msra.mxu0 %v472
    %556 = vmatmul.f32.gmra.mxu0 %v464
    %v557 = vpop.f32.mrf.mxu0
    %v558 = vadd.f32 %v538, %v557
    %559 = vmatmul.f32.gmra.mxu0 %v468
    %v560 = vpop.f32.mrf.mxu0
    %v561 = vadd.f32 %v538, %v560
    %562 = vdwg.mxu0
    %563 = vmatpush.msra.mxu0 %v503
    %564 = vmatpush.msra.mxu0 %v502
    %565 = vmatpush.msra.mxu0 %v501
    %566 = vmatpush.msra.mxu0 %v500
    %567 = vmatpush.msra.mxu0 %v499
    %568 = vmatpush.msra.mxu0 %v498
    %569 = vmatpush.msra.mxu0 %v497
    %570 = vmatpush.msra.mxu0 %v496
    %571 = vmatpush.msra.mxu0 %v495
    %572 = vmatpush.msra.mxu0 %v494
    %573 = vmatpush.msra.mxu0 %v493
    %574 = vmatpush.msra.mxu0 %v492
    %575 = vmatpush.msra.mxu0 %v491
    %576 = vmatpush.msra.mxu0 %v490
    %577 = vmatpush.msra.mxu0 %v489
    %578 = vmatpush.msra.mxu0 %v488
    %579 = vmatmul.f32.gmra.mxu0 %v465
    %v580 = vpop.f32.mrf.mxu0
    %v581 = vadd.f32 %v558, %v580
    %582 = vmatmul.f32.gmra.mxu0 %v469
    %v583 = vpop.f32.mrf.mxu0
    %v584 = vadd.f32 %v561, %v583
    %585 = vdwg.mxu0
    %586 = vmatpush.msra.mxu0 %v519
    %587 = vmatpush.msra.mxu0 %v518
    %588 = vmatpush.msra.mxu0 %v517
    %589 = vmatpush.msra.mxu0 %v516
    %590 = vmatpush.msra.mxu0 %v515
    %591 = vmatpush.msra.mxu0 %v514
    %592 = vmatpush.msra.mxu0 %v513
    %593 = vmatpush.msra.mxu0 %v512
    %594 = vmatpush.msra.mxu0 %v511
    %595 = vmatpush.msra.mxu0 %v510
    %596 = vmatpush.msra.mxu0 %v509
    %597 = vmatpush.msra.mxu0 %v508
    %598 = vmatpush.msra.mxu0 %v507
    %599 = vmatpush.msra.mxu0 %v506
    %600 = vmatpush.msra.mxu0 %v505
    %601 = vmatpush.msra.mxu0 %v504
    %602 = vmatmul.f32.gmra.mxu0 %v466
    %v603 = vpop.f32.mrf.mxu0
    %v604 = vadd.f32 %v581, %v603
    %605 = vmatmul.f32.gmra.mxu0 %v470
    %v606 = vpop.f32.mrf.mxu0
    %v607 = vadd.f32 %v584, %v606
    %608 = vdwg.mxu0
    %609 = vmatpush.msra.mxu0 %v535
    %610 = vmatpush.msra.mxu0 %v534
    %611 = vmatpush.msra.mxu0 %v533
    %612 = vmatpush.msra.mxu0 %v532
    %613 = vmatpush.msra.mxu0 %v531
    %614 = vmatpush.msra.mxu0 %v530
    %615 = vmatpush.msra.mxu0 %v529
    %616 = vmatpush.msra.mxu0 %v528
    %617 = vmatpush.msra.mxu0 %v527
    %618 = vmatpush.msra.mxu0 %v526
    %619 = vmatpush.msra.mxu0 %v525
    %620 = vmatpush.msra.mxu0 %v524
    %621 = vmatpush.msra.mxu0 %v523
    %622 = vmatpush.msra.mxu0 %v522
    %623 = vmatpush.msra.mxu0 %v521
    %624 = vmatpush.msra.mxu0 %v520
    %625 = vmatmul.f32.gmra.mxu0 %v467
    %v626 = vpop.f32.mrf.mxu0
    %v627 = vadd.f32 %v604, %v626
    %628 = vmatmul.f32.gmra.mxu0 %v471
    %v629 = vpop.f32.mrf.mxu0
    %v630 = vadd.f32 %v607, %v629
    %631 = vdwg.mxu0
    %v632 = vld [vmem:[#allocation11] sm:$0xff]
    %v633 = vld [vmem:[#allocation11 + $0x8] sm:$0xff]
    %v634 = vld [vmem:[#allocation11 + $0x10] sm:$0xff]
    %v635 = vld [vmem:[#allocation11 + $0x18] sm:$0xff]
    %v636 = vld [vmem:[#allocation11 + $0x20] sm:$0xff]
    %v637 = vld [vmem:[#allocation11 + $0x28] sm:$0xff]
    %v638 = vld [vmem:[#allocation11 + $0x30] sm:$0xff]
    %v639 = vld [vmem:[#allocation11 + $0x38] sm:$0xff]
    %v640 = vld [vmem:[#allocation11 + $0x40] sm:$0xff]
    %v641 = vld [vmem:[#allocation11 + $0x48] sm:$0xff]
    %v642 = vld [vmem:[#allocation11 + $0x50] sm:$0xff]
    %v643 = vld [vmem:[#allocation11 + $0x58] sm:$0xff]
    %v644 = vld [vmem:[#allocation11 + $0x60] sm:$0xff]
    %v645 = vld [vmem:[#allocation11 + $0x68] sm:$0xff]
    %v646 = vld [vmem:[#allocation11 + $0x70] sm:$0xff]
    %v647 = vld [vmem:[#allocation11 + $0x78] sm:$0xff]
    %v648 = vld [vmem:[#allocation11 + $0x80] sm:$0xff]
    %v649 = vld [vmem:[#allocation11 + $0x88] sm:$0xff]
    %v650 = vld [vmem:[#allocation11 + $0x90] sm:$0xff]
    %v651 = vld [vmem:[#allocation11 + $0x98] sm:$0xff]
    %v652 = vld [vmem:[#allocation11 + $0xa0] sm:$0xff]
    %v653 = vld [vmem:[#allocation11 + $0xa8] sm:$0xff]
    %v654 = vld [vmem:[#allocation11 + $0xb0] sm:$0xff]
    %v655 = vld [vmem:[#allocation11 + $0xb8] sm:$0xff]
    %v656 = vld [vmem:[#allocation11 + $0xc0] sm:$0xff]
    %v657 = vld [vmem:[#allocation11 + $0xc8] sm:$0xff]
    %v658 = vld [vmem:[#allocation11 + $0xd0] sm:$0xff]
    %v659 = vld [vmem:[#allocation11 + $0xd8] sm:$0xff]
    %v660 = vld [vmem:[#allocation11 + $0xe0] sm:$0xff]
    %v661 = vld [vmem:[#allocation11 + $0xe8] sm:$0xff]
    %v662 = vld [vmem:[#allocation11 + $0xf0] sm:$0xff]
    %v663 = vld [vmem:[#allocation11 + $0xf8] sm:$0xff]
    %v664 = vld [vmem:[#allocation11 + $0x100] sm:$0xff]
    %v665 = vld [vmem:[#allocation11 + $0x108] sm:$0xff]
    %v666 = vld [vmem:[#allocation11 + $0x110] sm:$0xff]
    %v667 = vld [vmem:[#allocation11 + $0x118] sm:$0xff]
    %v668 = vld [vmem:[#allocation11 + $0x120] sm:$0xff]
    %v669 = vld [vmem:[#allocation11 + $0x128] sm:$0xff]
    %v670 = vld [vmem:[#allocation11 + $0x130] sm:$0xff]
    %v671 = vld [vmem:[#allocation11 + $0x138] sm:$0xff]
    %v672 = vld [vmem:[#allocation11 + $0x140] sm:$0xff]
    %v673 = vld [vmem:[#allocation11 + $0x148] sm:$0xff]
    %v674 = vld [vmem:[#allocation11 + $0x150] sm:$0xff]
    %v675 = vld [vmem:[#allocation11 + $0x158] sm:$0xff]
    %v676 = vld [vmem:[#allocation11 + $0x160] sm:$0xff]
    %v677 = vld [vmem:[#allocation11 + $0x168] sm:$0xff]
    %v678 = vld [vmem:[#allocation11 + $0x170] sm:$0xff]
    %v679 = vld [vmem:[#allocation11 + $0x178] sm:$0xff]
    %v680 = vld [vmem:[#allocation11 + $0x180] sm:$0xff]
    %v681 = vld [vmem:[#allocation11 + $0x188] sm:$0xff]
    %v682 = vld [vmem:[#allocation11 + $0x190] sm:$0xff]
    %v683 = vld [vmem:[#allocation11 + $0x198] sm:$0xff]
    %v684 = vld [vmem:[#allocation11 + $0x1a0] sm:$0xff]
    %v685 = vld [vmem:[#allocation11 + $0x1a8] sm:$0xff]
    %v686 = vld [vmem:[#allocation11 + $0x1b0] sm:$0xff]
    %v687 = vld [vmem:[#allocation11 + $0x1b8] sm:$0xff]
    %v688 = vld [vmem:[#allocation11 + $0x1c0] sm:$0xff]
    %v689 = vld [vmem:[#allocation11 + $0x1c8] sm:$0xff]
    %v690 = vld [vmem:[#allocation11 + $0x1d0] sm:$0xff]
    %v691 = vld [vmem:[#allocation11 + $0x1d8] sm:$0xff]
    %v692 = vld [vmem:[#allocation11 + $0x1e0] sm:$0xff]
    %v693 = vld [vmem:[#allocation11 + $0x1e8] sm:$0xff]
    %v694 = vld [vmem:[#allocation11 + $0x1f0] sm:$0xff]
    %v695 = vld [vmem:[#allocation11 + $0x1f8] sm:$0xff]
    %v696 = vld [vmem:[%s6] sm:$0xf]
    %v698 = vperm.slane %v696, 0
    %v699 = vperm.slane %v696, 1
    %v700 = vperm.slane %v696, 2
    %v701 = vperm.slane %v696, 3
    %706 = vmatpush.msra.mxu0 %v692
    %707 = vmatpush.msra.mxu0 %v688
    %708 = vmatpush.msra.mxu0 %v684
    %709 = vmatpush.msra.mxu0 %v680
    %710 = vmatpush.msra.mxu0 %v676
    %711 = vmatpush.msra.mxu0 %v672
    %712 = vmatpush.msra.mxu0 %v668
    %713 = vmatpush.msra.mxu0 %v664
    %714 = vmatpush.msra.mxu0 %v660
    %715 = vmatpush.msra.mxu0 %v656
    %716 = vmatpush.msra.mxu0 %v652
    %717 = vmatpush.msra.mxu0 %v648
    %718 = vmatpush.msra.mxu0 %v644
    %719 = vmatpush.msra.mxu0 %v640
    %720 = vmatpush.msra.mxu0 %v636
    %721 = vmatpush.msra.mxu0 %v632
    %722 = vmatmul.f32.gmra.mxu0 %v627
    %v723 = vpop.f32.mrf.mxu0
    %v724 = vadd.f32 %v698, %v723
    %725 = vmatmul.f32.gmra.mxu0 %v630
    %v726 = vpop.f32.mrf.mxu0
    %v727 = vadd.f32 %v698, %v726
    %728 = vdwg.mxu0
    %729 = vmatpush.msra.mxu0 %v693
    %730 = vmatpush.msra.mxu0 %v689
    %731 = vmatpush.msra.mxu0 %v685
    %732 = vmatpush.msra.mxu0 %v681
    %733 = vmatpush.msra.mxu0 %v677
    %734 = vmatpush.msra.mxu0 %v673
    %735 = vmatpush.msra.mxu0 %v669
    %736 = vmatpush.msra.mxu0 %v665
    %737 = vmatpush.msra.mxu0 %v661
    %738 = vmatpush.msra.mxu0 %v657
    %739 = vmatpush.msra.mxu0 %v653
    %740 = vmatpush.msra.mxu0 %v649
    %741 = vmatpush.msra.mxu0 %v645
    %742 = vmatpush.msra.mxu0 %v641
    %743 = vmatpush.msra.mxu0 %v637
    %744 = vmatpush.msra.mxu0 %v633
    %745 = vmatmul.f32.gmra.mxu0 %v627
    %v746 = vpop.f32.mrf.mxu0
    %v747 = vadd.f32 %v699, %v746
    %748 = vmatmul.f32.gmra.mxu0 %v630
    %v749 = vpop.f32.mrf.mxu0
    %v750 = vadd.f32 %v699, %v749
    %751 = vdwg.mxu0
    %752 = vmatpush.msra.mxu0 %v694
    %753 = vmatpush.msra.mxu0 %v690
    %754 = vmatpush.msra.mxu0 %v686
    %755 = vmatpush.msra.mxu0 %v682
    %756 = vmatpush.msra.mxu0 %v678
    %757 = vmatpush.msra.mxu0 %v674
    %758 = vmatpush.msra.mxu0 %v670
    %759 = vmatpush.msra.mxu0 %v666
    %760 = vmatpush.msra.mxu0 %v662
    %761 = vmatpush.msra.mxu0 %v658
    %762 = vmatpush.msra.mxu0 %v654
    %763 = vmatpush.msra.mxu0 %v650
    %764 = vmatpush.msra.mxu0 %v646
    %765 = vmatpush.msra.mxu0 %v642
    %766 = vmatpush.msra.mxu0 %v638
    %767 = vmatpush.msra.mxu0 %v634
    %768 = vmatmul.f32.gmra.mxu0 %v627
    %v769 = vpop.f32.mrf.mxu0
    %v770 = vadd.f32 %v700, %v769
    %771 = vmatmul.f32.gmra.mxu0 %v630
    %v772 = vpop.f32.mrf.mxu0
    %v773 = vadd.f32 %v700, %v772
    %774 = vdwg.mxu0
    %775 = vmatpush.msra.mxu0 %v695
    %776 = vmatpush.msra.mxu0 %v691
    %777 = vmatpush.msra.mxu0 %v687
    %778 = vmatpush.msra.mxu0 %v683
    %779 = vmatpush.msra.mxu0 %v679
    %780 = vmatpush.msra.mxu0 %v675
    %781 = vmatpush.msra.mxu0 %v671
    %782 = vmatpush.msra.mxu0 %v667
    %783 = vmatpush.msra.mxu0 %v663
    %784 = vmatpush.msra.mxu0 %v659
    %785 = vmatpush.msra.mxu0 %v655
    %786 = vmatpush.msra.mxu0 %v651
    %787 = vmatpush.msra.mxu0 %v647
    %788 = vmatpush.msra.mxu0 %v643
    %789 = vmatpush.msra.mxu0 %v639
    %790 = vmatpush.msra.mxu0 %v635
    %791 = vmatmul.f32.gmra.mxu0 %v627
    %v792 = vpop.f32.mrf.mxu0
    %v793 = vadd.f32 %v701, %v792
    %794 = vmatmul.f32.gmra.mxu0 %v630
    %v795 = vpop.f32.mrf.mxu0
    %v796 = vadd.f32 %v701, %v795
    %797 = vdwg.mxu0
    %v798 = vmax.f32 %v724, 0.0
    %v799 = vmax.f32 %v747, 0.0
    %v800 = vmax.f32 %v770, 0.0
    %v801 = vmax.f32 %v793, 0.0
    %v802 = vmax.f32 %v727, 0.0
    %v803 = vmax.f32 %v750, 0.0
    %v804 = vmax.f32 %v773, 0.0
    %v805 = vmax.f32 %v796, 0.0
    %v806 = vld [vmem:[#allocation13] sm:$0xff]
    %v807 = vld [vmem:[#allocation13 + $0x8] sm:$0xff]
    %v808 = vld [vmem:[#allocation13 + $0x10] sm:$0xff]
    %v809 = vld [vmem:[#allocation13 + $0x18] sm:$0xff]
    %v810 = vld [vmem:[#allocation13 + $0x20] sm:$0xff]
    %v811 = vld [vmem:[#allocation13 + $0x28] sm:$0xff]
    %v812 = vld [vmem:[#allocation13 + $0x30] sm:$0xff]
    %v813 = vld [vmem:[#allocation13 + $0x38] sm:$0xff]
    %v814 = vld [vmem:[#allocation13 + $0x40] sm:$0xff]
    %v815 = vld [vmem:[#allocation13 + $0x48] sm:$0xff]
    %v816 = vld [vmem:[#allocation13 + $0x50] sm:$0xff]
    %v817 = vld [vmem:[#allocation13 + $0x58] sm:$0xff]
    %v818 = vld [vmem:[#allocation13 + $0x60] sm:$0xff]
    %v819 = vld [vmem:[#allocation13 + $0x68] sm:$0xff]
    %v820 = vld [vmem:[#allocation13 + $0x70] sm:$0xff]
    %v821 = vld [vmem:[#allocation13 + $0x78] sm:$0xff]
    %v822 = vld [vmem:[#allocation13 + $0x80] sm:$0xff]
    %v823 = vld [vmem:[#allocation13 + $0x88] sm:$0xff]
    %v824 = vld [vmem:[#allocation13 + $0x90] sm:$0xff]
    %v825 = vld [vmem:[#allocation13 + $0x98] sm:$0xff]
    %v826 = vld [vmem:[#allocation13 + $0xa0] sm:$0xff]
    %v827 = vld [vmem:[#allocation13 + $0xa8] sm:$0xff]
    %v828 = vld [vmem:[#allocation13 + $0xb0] sm:$0xff]
    %v829 = vld [vmem:[#allocation13 + $0xb8] sm:$0xff]
    %v830 = vld [vmem:[#allocation13 + $0xc0] sm:$0xff]
    %v831 = vld [vmem:[#allocation13 + $0xc8] sm:$0xff]
    %v832 = vld [vmem:[#allocation13 + $0xd0] sm:$0xff]
    %v833 = vld [vmem:[#allocation13 + $0xd8] sm:$0xff]
    %v834 = vld [vmem:[#allocation13 + $0xe0] sm:$0xff]
    %v835 = vld [vmem:[#allocation13 + $0xe8] sm:$0xff]
    %v836 = vld [vmem:[#allocation13 + $0xf0] sm:$0xff]
    %v837 = vld [vmem:[#allocation13 + $0xf8] sm:$0xff]
    %v838 = vld [vmem:[#allocation13 + $0x100] sm:$0xff]
    %v839 = vld [vmem:[#allocation13 + $0x108] sm:$0xff]
    %v840 = vld [vmem:[#allocation13 + $0x110] sm:$0xff]
    %v841 = vld [vmem:[#allocation13 + $0x118] sm:$0xff]
    %v842 = vld [vmem:[#allocation13 + $0x120] sm:$0xff]
    %v843 = vld [vmem:[#allocation13 + $0x128] sm:$0xff]
    %v844 = vld [vmem:[#allocation13 + $0x130] sm:$0xff]
    %v845 = vld [vmem:[#allocation13 + $0x138] sm:$0xff]
    %v846 = vld [vmem:[#allocation13 + $0x140] sm:$0xff]
    %v847 = vld [vmem:[#allocation13 + $0x148] sm:$0xff]
    %v848 = vld [vmem:[#allocation13 + $0x150] sm:$0xff]
    %v849 = vld [vmem:[#allocation13 + $0x158] sm:$0xff]
    %v850 = vld [vmem:[#allocation13 + $0x160] sm:$0xff]
    %v851 = vld [vmem:[#allocation13 + $0x168] sm:$0xff]
    %v852 = vld [vmem:[#allocation13 + $0x170] sm:$0xff]
    %v853 = vld [vmem:[#allocation13 + $0x178] sm:$0xff]
    %v854 = vld [vmem:[#allocation13 + $0x180] sm:$0xff]
    %v855 = vld [vmem:[#allocation13 + $0x188] sm:$0xff]
    %v856 = vld [vmem:[#allocation13 + $0x190] sm:$0xff]
    %v857 = vld [vmem:[#allocation13 + $0x198] sm:$0xff]
    %v858 = vld [vmem:[#allocation13 + $0x1a0] sm:$0xff]
    %v859 = vld [vmem:[#allocation13 + $0x1a8] sm:$0xff]
    %v860 = vld [vmem:[#allocation13 + $0x1b0] sm:$0xff]
    %v861 = vld [vmem:[#allocation13 + $0x1b8] sm:$0xff]
    %v862 = vld [vmem:[#allocation13 + $0x1c0] sm:$0xff]
    %v863 = vld [vmem:[#allocation13 + $0x1c8] sm:$0xff]
    %v864 = vld [vmem:[#allocation13 + $0x1d0] sm:$0xff]
    %v865 = vld [vmem:[#allocation13 + $0x1d8] sm:$0xff]
    %v866 = vld [vmem:[#allocation13 + $0x1e0] sm:$0xff]
    %v867 = vld [vmem:[#allocation13 + $0x1e8] sm:$0xff]
    %v868 = vld [vmem:[#allocation13 + $0x1f0] sm:$0xff]
    %v869 = vld [vmem:[#allocation13 + $0x1f8] sm:$0xff]
    %v870 = vld [vmem:[#allocation13 + $0x200] sm:$0xff]
    %v871 = vld [vmem:[#allocation13 + $0x208] sm:$0xff]
    %v872 = vld [vmem:[#allocation13 + $0x210] sm:$0xff]
    %v873 = vld [vmem:[#allocation13 + $0x218] sm:$0xff]
    %v874 = vld [vmem:[#allocation13 + $0x220] sm:$0xff]
    %v875 = vld [vmem:[#allocation13 + $0x228] sm:$0xff]
    %v876 = vld [vmem:[#allocation13 + $0x230] sm:$0xff]
    %v877 = vld [vmem:[#allocation13 + $0x238] sm:$0xff]
    %v878 = vld [vmem:[#allocation13 + $0x240] sm:$0xff]
    %v879 = vld [vmem:[#allocation13 + $0x248] sm:$0xff]
    %v880 = vld [vmem:[#allocation13 + $0x250] sm:$0xff]
    %v881 = vld [vmem:[#allocation13 + $0x258] sm:$0xff]
    %v882 = vld [vmem:[#allocation13 + $0x260] sm:$0xff]
    %v883 = vld [vmem:[#allocation13 + $0x268] sm:$0xff]
    %v884 = vld [vmem:[#allocation13 + $0x270] sm:$0xff]
    %v885 = vld [vmem:[#allocation13 + $0x278] sm:$0xff]
    %v886 = vld [vmem:[#allocation13 + $0x280] sm:$0xff]
    %v887 = vld [vmem:[#allocation13 + $0x288] sm:$0xff]
    %v888 = vld [vmem:[#allocation13 + $0x290] sm:$0xff]
    %v889 = vld [vmem:[#allocation13 + $0x298] sm:$0xff]
    %v890 = vld [vmem:[#allocation13 + $0x2a0] sm:$0xff]
    %v891 = vld [vmem:[#allocation13 + $0x2a8] sm:$0xff]
    %v892 = vld [vmem:[#allocation13 + $0x2b0] sm:$0xff]
    %v893 = vld [vmem:[#allocation13 + $0x2b8] sm:$0xff]
    %v894 = vld [vmem:[#allocation13 + $0x2c0] sm:$0xff]
    %v895 = vld [vmem:[#allocation13 + $0x2c8] sm:$0xff]
    %v896 = vld [vmem:[#allocation13 + $0x2d0] sm:$0xff]
    %v897 = vld [vmem:[#allocation13 + $0x2d8] sm:$0xff]
    %v898 = vld [vmem:[#allocation13 + $0x2e0] sm:$0xff]
    %v899 = vld [vmem:[#allocation13 + $0x2e8] sm:$0xff]
    %v900 = vld [vmem:[#allocation13 + $0x2f0] sm:$0xff]
    %v901 = vld [vmem:[#allocation13 + $0x2f8] sm:$0xff]
    %v902 = vld [vmem:[#allocation13 + $0x300] sm:$0xff]
    %v903 = vld [vmem:[#allocation13 + $0x308] sm:$0xff]
    %v904 = vld [vmem:[#allocation13 + $0x310] sm:$0xff]
    %v905 = vld [vmem:[#allocation13 + $0x318] sm:$0xff]
    %v906 = vld [vmem:[#allocation13 + $0x320] sm:$0xff]
    %v907 = vld [vmem:[#allocation13 + $0x328] sm:$0xff]
    %v908 = vld [vmem:[#allocation13 + $0x330] sm:$0xff]
    %v909 = vld [vmem:[#allocation13 + $0x338] sm:$0xff]
    %v910 = vld [vmem:[#allocation13 + $0x340] sm:$0xff]
    %v911 = vld [vmem:[#allocation13 + $0x348] sm:$0xff]
    %v912 = vld [vmem:[#allocation13 + $0x350] sm:$0xff]
    %v913 = vld [vmem:[#allocation13 + $0x358] sm:$0xff]
    %v914 = vld [vmem:[#allocation13 + $0x360] sm:$0xff]
    %v915 = vld [vmem:[#allocation13 + $0x368] sm:$0xff]
    %v916 = vld [vmem:[#allocation13 + $0x370] sm:$0xff]
    %v917 = vld [vmem:[#allocation13 + $0x378] sm:$0xff]
    %v918 = vld [vmem:[#allocation13 + $0x380] sm:$0xff]
    %v919 = vld [vmem:[#allocation13 + $0x388] sm:$0xff]
    %v920 = vld [vmem:[#allocation13 + $0x390] sm:$0xff]
    %v921 = vld [vmem:[#allocation13 + $0x398] sm:$0xff]
    %v922 = vld [vmem:[#allocation13 + $0x3a0] sm:$0xff]
    %v923 = vld [vmem:[#allocation13 + $0x3a8] sm:$0xff]
    %v924 = vld [vmem:[#allocation13 + $0x3b0] sm:$0xff]
    %v925 = vld [vmem:[#allocation13 + $0x3b8] sm:$0xff]
    %v926 = vld [vmem:[#allocation13 + $0x3c0] sm:$0xff]
    %v927 = vld [vmem:[#allocation13 + $0x3c8] sm:$0xff]
    %v928 = vld [vmem:[#allocation13 + $0x3d0] sm:$0xff]
    %v929 = vld [vmem:[#allocation13 + $0x3d8] sm:$0xff]
    %v930 = vld [vmem:[#allocation13 + $0x3e0] sm:$0xff]
    %v931 = vld [vmem:[#allocation13 + $0x3e8] sm:$0xff]
    %v932 = vld [vmem:[#allocation13 + $0x3f0] sm:$0xff]
    %v933 = vld [vmem:[#allocation13 + $0x3f8] sm:$0xff]
    %v934 = vld [vmem:[%s8] sm:$0x3]
    %v936 = vperm.slane %v934, 0
    %v937 = vperm.slane %v934, 1
    %940 = vmatpush.msra.mxu0 %v836
    %941 = vmatpush.msra.mxu0 %v834
    %942 = vmatpush.msra.mxu0 %v832
    %943 = vmatpush.msra.mxu0 %v830
    %944 = vmatpush.msra.mxu0 %v828
    %945 = vmatpush.msra.mxu0 %v826
    %946 = vmatpush.msra.mxu0 %v824
    %947 = vmatpush.msra.mxu0 %v822
    %948 = vmatpush.msra.mxu0 %v820
    %949 = vmatpush.msra.mxu0 %v818
    %950 = vmatpush.msra.mxu0 %v816
    %951 = vmatpush.msra.mxu0 %v814
    %952 = vmatpush.msra.mxu0 %v812
    %953 = vmatpush.msra.mxu0 %v810
    %954 = vmatpush.msra.mxu0 %v808
    %955 = vmatpush.msra.mxu0 %v806
    %956 = vmatmul.f32.gmra.mxu0 %v798
    %v957 = vpop.f32.mrf.mxu0
    %v958 = vadd.f32 %v936, %v957
    %959 = vmatmul.f32.gmra.mxu0 %v802
    %v960 = vpop.f32.mrf.mxu0
    %v961 = vadd.f32 %v936, %v960
    %962 = vdwg.mxu0
    %963 = vmatpush.msra.mxu0 %v868
    %964 = vmatpush.msra.mxu0 %v866
    %965 = vmatpush.msra.mxu0 %v864
    %966 = vmatpush.msra.mxu0 %v862
    %967 = vmatpush.msra.mxu0 %v860
    %968 = vmatpush.msra.mxu0 %v858
    %969 = vmatpush.msra.mxu0 %v856
    %970 = vmatpush.msra.mxu0 %v854
    %971 = vmatpush.msra.mxu0 %v852
    %972 = vmatpush.msra.mxu0 %v850
    %973 = vmatpush.msra.mxu0 %v848
    %974 = vmatpush.msra.mxu0 %v846
    %975 = vmatpush.msra.mxu0 %v844
    %976 = vmatpush.msra.mxu0 %v842
    %977 = vmatpush.msra.mxu0 %v840
    %978 = vmatpush.msra.mxu0 %v838
    %979 = vmatmul.f32.gmra.mxu0 %v799
    %v980 = vpop.f32.mrf.mxu0
    %v981 = vadd.f32 %v958, %v980
    %982 = vmatmul.f32.gmra.mxu0 %v803
    %v983 = vpop.f32.mrf.mxu0
    %v984 = vadd.f32 %v961, %v983
    %985 = vdwg.mxu0
    %986 = vmatpush.msra.mxu0 %v900
    %987 = vmatpush.msra.mxu0 %v898
    %988 = vmatpush.msra.mxu0 %v896
    %989 = vmatpush.msra.mxu0 %v894
    %990 = vmatpush.msra.mxu0 %v892
    %991 = vmatpush.msra.mxu0 %v890
    %992 = vmatpush.msra.mxu0 %v888
    %993 = vmatpush.msra.mxu0 %v886
    %994 = vmatpush.msra.mxu0 %v884
    %995 = vmatpush.msra.mxu0 %v882
    %996 = vmatpush.msra.mxu0 %v880
    %997 = vmatpush.msra.mxu0 %v878
    %998 = vmatpush.msra.mxu0 %v876
    %999 = vmatpush.msra.mxu0 %v874
    %1000 = vmatpush.msra.mxu0 %v872
    %1001 = vmatpush.msra.mxu0 %v870
    %1002 = vmatmul.f32.gmra.mxu0 %v800
    %v1003 = vpop.f32.mrf.mxu0
    %v1004 = vadd.f32 %v981, %v1003
    %1005 = vmatmul.f32.gmra.mxu0 %v804
    %v1006 = vpop.f32.mrf.mxu0
    %v1007 = vadd.f32 %v984, %v1006
    %1008 = vdwg.mxu0
    %1009 = vmatpush.msra.mxu0 %v932
    %1010 = vmatpush.msra.mxu0 %v930
    %1011 = vmatpush.msra.mxu0 %v928
    %1012 = vmatpush.msra.mxu0 %v926
    %1013 = vmatpush.msra.mxu0 %v924
    %1014 = vmatpush.msra.mxu0 %v922
    %1015 = vmatpush.msra.mxu0 %v920
    %1016 = vmatpush.msra.mxu0 %v918
    %1017 = vmatpush.msra.mxu0 %v916
    %1018 = vmatpush.msra.mxu0 %v914
    %1019 = vmatpush.msra.mxu0 %v912
    %1020 = vmatpush.msra.mxu0 %v910
    %1021 = vmatpush.msra.mxu0 %v908
    %1022 = vmatpush.msra.mxu0 %v906
    %1023 = vmatpush.msra.mxu0 %v904
    %1024 = vmatpush.msra.mxu0 %v902
    %1025 = vmatmul.f32.gmra.mxu0 %v801
    %v1026 = vpop.f32.mrf.mxu0
    %v1027 = vadd.f32 %v1004, %v1026
    %1028 = vmatmul.f32.gmra.mxu0 %v805
    %v1029 = vpop.f32.mrf.mxu0
    %v1030 = vadd.f32 %v1007, %v1029
    %1031 = vdwg.mxu0
    %1032 = vmatpush.msra.mxu0 %v837
    %1033 = vmatpush.msra.mxu0 %v835
    %1034 = vmatpush.msra.mxu0 %v833
    %1035 = vmatpush.msra.mxu0 %v831
    %1036 = vmatpush.msra.mxu0 %v829
    %1037 = vmatpush.msra.mxu0 %v827
    %1038 = vmatpush.msra.mxu0 %v825
    %1039 = vmatpush.msra.mxu0 %v823
    %1040 = vmatpush.msra.mxu0 %v821
    %1041 = vmatpush.msra.mxu0 %v819
    %1042 = vmatpush.msra.mxu0 %v817
    %1043 = vmatpush.msra.mxu0 %v815
    %1044 = vmatpush.msra.mxu0 %v813
    %1045 = vmatpush.msra.mxu0 %v811
    %1046 = vmatpush.msra.mxu0 %v809
    %1047 = vmatpush.msra.mxu0 %v807
    %1048 = vmatmul.f32.gmra.mxu0 %v798
    %v1049 = vpop.f32.mrf.mxu0
    %v1050 = vadd.f32 %v937, %v1049
    %1051 = vmatmul.f32.gmra.mxu0 %v802
    %v1052 = vpop.f32.mrf.mxu0
    %v1053 = vadd.f32 %v937, %v1052
    %1054 = vdwg.mxu0
    %1055 = vmatpush.msra.mxu0 %v869
    %1056 = vmatpush.msra.mxu0 %v867
    %1057 = vmatpush.msra.mxu0 %v865
    %1058 = vmatpush.msra.mxu0 %v863
    %1059 = vmatpush.msra.mxu0 %v861
    %1060 = vmatpush.msra.mxu0 %v859
    %1061 = vmatpush.msra.mxu0 %v857
    %1062 = vmatpush.msra.mxu0 %v855
    %1063 = vmatpush.msra.mxu0 %v853
    %1064 = vmatpush.msra.mxu0 %v851
    %1065 = vmatpush.msra.mxu0 %v849
    %1066 = vmatpush.msra.mxu0 %v847
    %1067 = vmatpush.msra.mxu0 %v845
    %1068 = vmatpush.msra.mxu0 %v843
    %1069 = vmatpush.msra.mxu0 %v841
    %1070 = vmatpush.msra.mxu0 %v839
    %1071 = vmatmul.f32.gmra.mxu0 %v799
    %v1072 = vpop.f32.mrf.mxu0
    %v1073 = vadd.f32 %v1050, %v1072
    %1074 = vmatmul.f32.gmra.mxu0 %v803
    %v1075 = vpop.f32.mrf.mxu0
    %v1076 = vadd.f32 %v1053, %v1075
    %1077 = vdwg.mxu0
    %1078 = vmatpush.msra.mxu0 %v901
    %1079 = vmatpush.msra.mxu0 %v899
    %1080 = vmatpush.msra.mxu0 %v897
    %1081 = vmatpush.msra.mxu0 %v895
    %1082 = vmatpush.msra.mxu0 %v893
    %1083 = vmatpush.msra.mxu0 %v891
    %1084 = vmatpush.msra.mxu0 %v889
    %1085 = vmatpush.msra.mxu0 %v887
    %1086 = vmatpush.msra.mxu0 %v885
    %1087 = vmatpush.msra.mxu0 %v883
    %1088 = vmatpush.msra.mxu0 %v881
    %1089 = vmatpush.msra.mxu0 %v879
    %1090 = vmatpush.msra.mxu0 %v877
    %1091 = vmatpush.msra.mxu0 %v875
    %1092 = vmatpush.msra.mxu0 %v873
    %1093 = vmatpush.msra.mxu0 %v871
    %1094 = vmatmul.f32.gmra.mxu0 %v800
    %v1095 = vpop.f32.mrf.mxu0
    %v1096 = vadd.f32 %v1073, %v1095
    %1097 = vmatmul.f32.gmra.mxu0 %v804
    %v1098 = vpop.f32.mrf.mxu0
    %v1099 = vadd.f32 %v1076, %v1098
    %1100 = vdwg.mxu0
    %1101 = vmatpush.msra.mxu0 %v933
    %1102 = vmatpush.msra.mxu0 %v931
    %1103 = vmatpush.msra.mxu0 %v929
    %1104 = vmatpush.msra.mxu0 %v927
    %1105 = vmatpush.msra.mxu0 %v925
    %1106 = vmatpush.msra.mxu0 %v923
    %1107 = vmatpush.msra.mxu0 %v921
    %1108 = vmatpush.msra.mxu0 %v919
    %1109 = vmatpush.msra.mxu0 %v917
    %1110 = vmatpush.msra.mxu0 %v915
    %1111 = vmatpush.msra.mxu0 %v913
    %1112 = vmatpush.msra.mxu0 %v911
    %1113 = vmatpush.msra.mxu0 %v909
    %1114 = vmatpush.msra.mxu0 %v907
    %1115 = vmatpush.msra.mxu0 %v905
    %1116 = vmatpush.msra.mxu0 %v903
    %1117 = vmatmul.f32.gmra.mxu0 %v801
    %v1118 = vpop.f32.mrf.mxu0
    %v1119 = vadd.f32 %v1096, %v1118
    %1120 = vmatmul.f32.gmra.mxu0 %v805
    %v1121 = vpop.f32.mrf.mxu0
    %v1122 = vadd.f32 %v1099, %v1121
    %1123 = vdwg.mxu0
    %1124 = vst [vmem:[#allocation14] sm:$0xff] %v1027
    %1125 = vst [vmem:[#allocation14 + $0x8] sm:$0xff] %v1119
    %1126 = vst [vmem:[#allocation14 + $0x10] sm:$0xff] %v1030
    %1127 = vst [vmem:[#allocation14 + $0x18] sm:$0xff] %v1122
    // Predicated region
    $region66: #{tpu_custom_call.1} parent=1 // pred_check
      _
    $region67: #{tpu_custom_call.1} parent=1 // pred_check_branch
      %1129 = sbr.rel (0) target = $region69
    $region68: #{tpu_custom_call.1} parent=1 // pred_region
      %1131 = vsyncadd [#allocation4], 0
      %s1132 = sshll.u32 [#allocation14], 4
      %s1133 = int_to_ptr.vmem [resolvable:$true] %s1132
      %s1134 = sshll.u32 %s9, 4
      %s1135 = int_to_ptr.hbm [resolvable:$true] %s1134
      %1140 = dma.vmem_to_hbm [thread:$0]  %s1133, 512, %s1135, [#allocation4], 256, 256, 16
    $region69: #{tpu_custom_call.1} parent=1 // pred_fallthru
      _
    // Predicated region
    $region70: #{tpu_custom_call.1} parent=1 // pred_check
      _
    $region71: #{tpu_custom_call.1} parent=1 // pred_check_branch
      %1142 = sbr.rel (0) target = $region73
    $region72: #{tpu_custom_call.1} parent=1 // pred_region
      %1144 = dma.done [#allocation4], 512
    $region73: #{tpu_custom_call.1} parent=1 // pred_fallthru
      _
    %1145 = vsyncpa [#allocation3], 1
    %1146 = vsyncpa [#allocation6], 1
    %1147 = vsyncpa [#allocation9], 1
    %1148 = vsyncpa [#allocation12], 1
    %1149 = vsyncpa [#allocation4], 1

</llo_original>
